<compile_context>
chip_gen: v6e
topology: v6e:2x2x1
jax: 0.10.0
libtpu: 0.0.40
codegen_flags: <defaults>
</compile_context>

<pallas_src>
import jax
import jax.numpy as jnp
from jax.experimental import pallas as pl
from jax.experimental.pallas import tpu as pltpu

_SUB = 16        # sublane rounding for bf16 activations
_TB_CAP = 1024   # batch-tile cap (sweep 512/1024/2048 when tuning)


def qnet_fused_kernel(x_ref, wf_ref, b1f_ref, w2_ref, b2_ref, w3_ref, out_ref):
    """Fused Qnet forward for one batch tile (all operands VMEM-resident).

    x_ref  : [TB, Din] bf16   pre-concatenated [s_1,...,s_K, action] inputs
    wf     : [Din, 128] bf16  fused (layer_s/layer_a -> layer1) weight
    b1f    : [1, 128] f32     fused bias
    w2     : [128, 64] bf16,  b2 [1, 64] f32
    w3     : [1, 64] f32      layer3 weight as a row (VPU/XLU reduction)
    out    : [TB, 1] f32      (b3 is added in the wrapper)
    """
    # layer_s/layer_a/layer1 fused: h1 = relu(x @ Wf + b1f)  (MXU bf16, f32 acc)
    h1 = jnp.dot(x_ref[...], wf_ref[...], preferred_element_type=jnp.float32)
    h1 = jnp.maximum(h1 + b1f_ref[...], 0.0)
    # layer2: h2 = relu(h1 @ W2 + b2)
    h2 = jnp.dot(h1.astype(jnp.bfloat16), w2_ref[...],
                 preferred_element_type=jnp.float32)
    h2 = jnp.maximum(h2 + b2_ref[...], 0.0)
    # layer3 (N=1) on VPU/XLU instead of a 1-column MXU matmul.
    out_ref[...] = jnp.sum(h2 * w3_ref[...], axis=-1, keepdims=True)


def _round_up(x, m):
    return ((x + m - 1) // m) * m


def _pick_tiling(B):
    """Pick batch tile TB and padded batch Bp (both multiples of _SUB)."""
    Bp = _round_up(max(B, _SUB), _SUB)
    n_tiles = pl.cdiv(Bp, _TB_CAP)
    if Bp >= 2 * _SUB:
        # Keep >= 2 parallel grid steps so both v7x TensorCores are fed; the
        # one extra ~0.35us step is noise on 1-TC v5e/v6e.
        n_tiles = max(n_tiles, 2)
    TB = _round_up(pl.cdiv(Bp, n_tiles), _SUB)
    return TB, _round_up(Bp, TB)


def init_params(key, K, state1_dim=5, state2_dim=2):
    """Deterministic parameter init mirroring Qnet.__init__ shapes.

    Weights stored as [in_features, out_features] (pre-transposed).
    layer1/2/3 weights: kaiming normal (relu gain); others: uniform(+-1/sqrt(fan_in)).
    """
    ks = jax.random.split(key, 10)

    def uniform_linear(kw, kb, fan_in, fan_out):
        bound = 1.0 / jnp.sqrt(fan_in)
        w = jax.random.uniform(kw, (fan_in, fan_out), jnp.float32, -bound, bound)
        b = jax.random.uniform(kb, (1, fan_out), jnp.float32, -bound, bound)
        return w, b

    def kaiming_linear(kw, kb, fan_in, fan_out):
        w = jax.random.normal(kw, (fan_in, fan_out), jnp.float32) * jnp.sqrt(2.0 / fan_in)
        bound = 1.0 / jnp.sqrt(fan_in)
        b = jax.random.uniform(kb, (1, fan_out), jnp.float32, -bound, bound)
        return w, b

    ws, bs = uniform_linear(ks[0], ks[1], state1_dim + state2_dim, 64)
    wa, ba = uniform_linear(ks[2], ks[3], K + 1, 64)
    w1, b1 = kaiming_linear(ks[4], ks[5], 64 * (K + 1), 128)
    w2, b2 = kaiming_linear(ks[6], ks[7], 128, 64)
    w3, b3 = kaiming_linear(ks[8], ks[9], 64, 1)
    return dict(ws=ws, bs=bs, wa=wa, ba=ba, w1=w1, b1=b1,
                w2=w2, b2=b2, w3=w3, b3=b3)


def prepare_params(params, K, state1_dim=5):
    """One-time (per parameter update) fusion of layer_s/layer_a into layer1.

    Everything before the first ReLU is linear, so:
        Wf[i] = ws @ w1b[i]   (per state block),   Wf_a = wa @ w1b[K]
        b1f   = b1 + bs @ sum_i(w1b[i]) + ba @ w1b[K]
    Matmul operands are stored in bf16 (MXU-native); biases stay f32.
    """
    d_step = state1_dim + 2
    w1b = params["w1"].reshape(K + 1, 64, 128)                 # per-block weights
    wf_s = jnp.einsum("dh,khf->kdf", params["ws"], w1b[:K]).reshape(K * d_step, 128)
    wf_a = params["wa"] @ w1b[K]                               # [K+1, 128]
    wf = jnp.concatenate([wf_s, wf_a], axis=0)                 # [Din, 128]
    b1f = (params["b1"]
           + params["bs"] @ w1b[:K].sum(axis=0)
           + params["ba"] @ w1b[K])                            # [1, 128]
    return dict(
        wf=wf.astype(jnp.bfloat16),
        b1f=b1f.astype(jnp.float32),
        w2=params["w2"].astype(jnp.bfloat16),
        b2=params["b2"].astype(jnp.float32),
        w3_row=params["w3"].reshape(1, 64).astype(jnp.float32),
        b3=params["b3"].astype(jnp.float32),
    )


@jax.jit
def qnet_forward(s1_tensor, portfolio, action, fused):
    B, K, d1 = s1_tensor.shape
    d_step = d1 + 2  # state1_dim + 2 portfolio scalars

    # ---- glue: lane-dense 2D concatenated input [B, K*d_step + (K+1)] ----
    p0 = jnp.broadcast_to(portfolio[:, 0:1, :], (B, K, 1))   # portfolio[:, 0]
    pi = portfolio[:, 1:K + 1, :]                            # portfolio[:, i+1]
    s_all = jnp.concatenate([s1_tensor, p0, pi], axis=-1)    # [B, K, d_step]
    x_in = jnp.concatenate([s_all.reshape(B, K * d_step), action], axis=-1)
    x_in = x_in.astype(jnp.bfloat16)
    Din = x_in.shape[1]

    # ---- batch tiling: pad, large tile, >=2-step parallel grid when possible ----
    TB, Bp = _pick_tiling(B)
    if Bp != B:
        x_in = jnp.pad(x_in, ((0, Bp - B), (0, 0)))

    out = pl.pallas_call(
        qnet_fused_kernel,
        out_shape=jax.ShapeDtypeStruct((Bp, 1), jnp.float32),
        grid_spec=pltpu.PrefetchScalarGridSpec(
            num_scalar_prefetch=0,
            grid=(Bp // TB,),
            in_specs=[
                pl.BlockSpec((TB, Din), lambda i: (i, 0)),    # streamed activations
                pl.BlockSpec((Din, 128), lambda i: (0, 0)),   # weights stay resident
                pl.BlockSpec((1, 128), lambda i: (0, 0)),
                pl.BlockSpec((128, 64), lambda i: (0, 0)),
                pl.BlockSpec((1, 64), lambda i: (0, 0)),
                pl.BlockSpec((1, 64), lambda i: (0, 0)),
            ],
            out_specs=pl.BlockSpec((TB, 1), lambda i: (i, 0)),
        ),
        compiler_params=pltpu.CompilerParams(
            dimension_semantics=("parallel",)),
    )(x_in, fused["wf"], fused["b1f"], fused["w2"], fused["b2"],
      fused["w3_row"])
    # Fold the scalar bias b3 outside the kernel (cheaper than a (1,1) VMEM block).
    return out[:B] + fused["b3"]


def qnet_reference(s1_tensor, portfolio, action, params):
    """Pure-JAX f32 reference matching the PyTorch forward exactly."""
    B, K, _ = s1_tensor.shape
    scores = []
    for i in range(K):
        s = jnp.concatenate(
            [s1_tensor[:, i, :], portfolio[:, 0], portfolio[:, i + 1]], axis=-1)
        scores.append(s @ params["ws"] + params["bs"])
    a_vec = action @ params["wa"] + params["ba"]
    x = jnp.concatenate(scores + [a_vec], axis=-1)
    x = jnp.maximum(x @ params["w1"] + params["b1"], 0.0)
    x = jnp.maximum(x @ params["w2"] + params["b2"], 0.0)
    return x @ params["w3"] + params["b3"]


if __name__ == "__main__":
    K, state1_dim, state2_dim = 3, 5, 2
    key = jax.random.PRNGKey(0)
    k_s1, k_pf, k_ac, k_par = jax.random.split(key, 4)
    params = init_params(k_par, K, state1_dim, state2_dim)
    fused = prepare_params(params, K, state1_dim)   # hoisted out of the hot path

    # Tolerance loosened vs. the pure-f32 version because matmul operands are bf16.
    ATOL, RTOL = 1e-1, 5e-2

    # Small batch (pads 2 -> 16, single grid step).
    B = 2
    s1_tensor = jax.random.normal(k_s1, (B, K, state1_dim), jnp.float32)
    portfolio = jax.random.normal(k_pf, (B, K + 1, 1), jnp.float32)
    action = jax.random.normal(k_ac, (B, K + 1), jnp.float32)

    out = jax.block_until_ready(qnet_forward(s1_tensor, portfolio, action, fused))
    ref = qnet_reference(s1_tensor, portfolio, action, params)
    assert out.shape == (B, 1)
    assert jnp.allclose(out, ref, atol=ATOL, rtol=RTOL), (out, ref)

    # Larger batch exercises the multi-step parallel grid + padding path.
    B2 = 200
    s1_2 = jax.random.normal(k_s1, (B2, K, state1_dim), jnp.float32)
    pf_2 = jax.random.normal(k_pf, (B2, K + 1, 1), jnp.float32)
    ac_2 = jax.random.normal(k_ac, (B2, K + 1), jnp.float32)
    out2 = jax.block_until_ready(qnet_forward(s1_2, pf_2, ac_2, fused))
    ref2 = qnet_reference(s1_2, pf_2, ac_2, params)
    assert out2.shape == (B2, 1)
    assert jnp.allclose(out2, ref2, atol=ATOL, rtol=RTOL)

    print("KERNEL_OK")
</pallas_src>

<mosaic_0001>
module attributes {stable_mosaic.version = 11 : i64} {
  func.func @qnet_fused_kernel(%arg0: i32, %arg1: memref<16x25xbf16, #tpu.memory_space<vmem>>, %arg2: memref<25x128xbf16, #tpu.memory_space<vmem>>, %arg3: memref<1x128xf32, #tpu.memory_space<vmem>>, %arg4: memref<128x64xbf16, #tpu.memory_space<vmem>>, %arg5: memref<1x64xf32, #tpu.memory_space<vmem>>, %arg6: memref<1x64xf32, #tpu.memory_space<vmem>>, %arg7: memref<16x1xf32, #tpu.memory_space<vmem>>) attributes {dimension_semantics = [#tpu.dimension_semantics<parallel>], iteration_bounds = array<i64: 1>, scalar_prefetch = 0 : i64, scratch_operands = 0 : i64, tpu.core_type = #tpu.core_type<tc>, window_params = [{transform_indices = @transform_0, window_bounds = array<i64: 16, 25>}, {pipeline_mode = #tpu.pipeline_mode<synchronous>, transform_indices = @transform_1, window_bounds = array<i64: 25, 128>}, {pipeline_mode = #tpu.pipeline_mode<synchronous>, transform_indices = @transform_2, window_bounds = array<i64: 1, 128>}, {pipeline_mode = #tpu.pipeline_mode<synchronous>, transform_indices = @transform_3, window_bounds = array<i64: 128, 64>}, {pipeline_mode = #tpu.pipeline_mode<synchronous>, transform_indices = @transform_4, window_bounds = array<i64: 1, 64>}, {pipeline_mode = #tpu.pipeline_mode<synchronous>, transform_indices = @transform_5, window_bounds = array<i64: 1, 64>}, {transform_indices = @transform_6, window_bounds = array<i64: 16, 1>}]} {
    %c0 = arith.constant 0 : index
    %c0_0 = arith.constant 0 : index
    %0 = vector.load %arg1[%c0, %c0_0] : memref<16x25xbf16, #tpu.memory_space<vmem>>, vector<16x25xbf16>
    %c0_1 = arith.constant 0 : index
    %c0_2 = arith.constant 0 : index
    %1 = vector.load %arg2[%c0_1, %c0_2] : memref<25x128xbf16, #tpu.memory_space<vmem>>, vector<25x128xbf16>
    %cst = arith.constant dense<0.000000e+00> : vector<16x128xf32>
    %2 = tpu.matmul %0, %1, %cst {dimension_numbers = #tpu.dot_dimension_numbers<[1], [0], [0], [1], [0, 0, 1, 1], [], []>} : vector<16x25xbf16>, vector<25x128xbf16>, vector<16x128xf32> -> vector<16x128xf32>
    %c0_3 = arith.constant 0 : index
    %c0_4 = arith.constant 0 : index
    %3 = vector.load %arg3[%c0_3, %c0_4] : memref<1x128xf32, #tpu.memory_space<vmem>>, vector<1x128xf32>
    %4 = vector.broadcast %3 : vector<1x128xf32> to vector<16x128xf32>
    %5 = arith.addf %2, %4 : vector<16x128xf32>
    %cst_5 = arith.constant 0.000000e+00 : f32
    %6 = vector.broadcast %cst_5 : f32 to vector<16x128xf32>
    %7 = arith.maximumf %5, %6 : vector<16x128xf32>
    %8 = arith.truncf %7 : vector<16x128xf32> to vector<16x128xbf16>
    %c0_6 = arith.constant 0 : index
    %c0_7 = arith.constant 0 : index
    %9 = vector.load %arg4[%c0_6, %c0_7] : memref<128x64xbf16, #tpu.memory_space<vmem>>, vector<128x64xbf16>
    %cst_8 = arith.constant dense<0.000000e+00> : vector<16x64xf32>
    %10 = tpu.matmul %8, %9, %cst_8 {dimension_numbers = #tpu.dot_dimension_numbers<[1], [0], [0], [1], [0, 0, 1, 1], [], []>} : vector<16x128xbf16>, vector<128x64xbf16>, vector<16x64xf32> -> vector<16x64xf32>
    %c0_9 = arith.constant 0 : index
    %c0_10 = arith.constant 0 : index
    %11 = vector.load %arg5[%c0_9, %c0_10] : memref<1x64xf32, #tpu.memory_space<vmem>>, vector<1x64xf32>
    %12 = vector.broadcast %11 : vector<1x64xf32> to vector<16x64xf32>
    %13 = arith.addf %10, %12 : vector<16x64xf32>
    %cst_11 = arith.constant 0.000000e+00 : f32
    %14 = vector.broadcast %cst_11 : f32 to vector<16x64xf32>
    %15 = arith.maximumf %13, %14 : vector<16x64xf32>
    %c0_12 = arith.constant 0 : index
    %c0_13 = arith.constant 0 : index
    %16 = vector.load %arg6[%c0_12, %c0_13] : memref<1x64xf32, #tpu.memory_space<vmem>>, vector<1x64xf32>
    %17 = vector.broadcast %16 : vector<1x64xf32> to vector<16x64xf32>
    %18 = arith.mulf %15, %17 : vector<16x64xf32>
    %cst_14 = arith.constant dense<0.000000e+00> : vector<16xf32>
    %19 = vector.multi_reduction <add>, %18, %cst_14 [1] : vector<16x64xf32> to vector<16xf32>
    %20 = vector.shape_cast %19 : vector<16xf32> to vector<16x1xf32>
    %c0_15 = arith.constant 0 : index
    %c0_16 = arith.constant 0 : index
    %21 = vector.load %arg7[%c0_15, %c0_16] : memref<16x1xf32, #tpu.memory_space<vmem>>, vector<16x1xf32>
    tpu.vector_store %arg7[%c0_15, %c0_16], %20 {strides = array<i32>} : memref<16x1xf32, #tpu.memory_space<vmem>>, vector<16x1xf32>,
    return
  }
  func.func @transform_0(%arg0: i32) -> (i32, i32) {
    %c0_i32 = arith.constant 0 : i32
    %c0_i32_0 = arith.constant 0 : i32
    return %arg0, %c0_i32 : i32, i32
  }
  func.func @transform_1(%arg0: i32) -> (i32, i32) {
    %c0_i32 = arith.constant 0 : i32
    %c0_i32_0 = arith.constant 0 : i32
    %c0_i32_1 = arith.constant 0 : i32
    return %c0_i32, %c0_i32_0 : i32, i32
  }
  func.func @transform_2(%arg0: i32) -> (i32, i32) {
    %c0_i32 = arith.constant 0 : i32
    %c0_i32_0 = arith.constant 0 : i32
    %c0_i32_1 = arith.constant 0 : i32
    return %c0_i32, %c0_i32_0 : i32, i32
  }
  func.func @transform_3(%arg0: i32) -> (i32, i32) {
    %c0_i32 = arith.constant 0 : i32
    %c0_i32_0 = arith.constant 0 : i32
    %c0_i32_1 = arith.constant 0 : i32
    return %c0_i32, %c0_i32_0 : i32, i32
  }
  func.func @transform_4(%arg0: i32) -> (i32, i32) {
    %c0_i32 = arith.constant 0 : i32
    %c0_i32_0 = arith.constant 0 : i32
    %c0_i32_1 = arith.constant 0 : i32
    return %c0_i32, %c0_i32_0 : i32, i32
  }
  func.func @transform_5(%arg0: i32) -> (i32, i32) {
    %c0_i32 = arith.constant 0 : i32
    %c0_i32_0 = arith.constant 0 : i32
    %c0_i32_1 = arith.constant 0 : i32
    return %c0_i32, %c0_i32_0 : i32, i32
  }
  func.func @transform_6(%arg0: i32) -> (i32, i32) {
    %c0_i32 = arith.constant 0 : i32
    %c0_i32_0 = arith.constant 0 : i32
    return %arg0, %c0_i32 : i32, i32
  }
}

</mosaic_0001>

<llo_original>
// kernel: qnet_forward.1
$region0: #{qnet_forward.1}
  #allocation0 [shape = 'u32[]', space=smem, size = 0x4, offset = 0x4, fixed_abs, tag = 'smem constant byte address 0x4 - core index']
  #allocation1 [shape = 'u32[144,128]{1,0:T(1,128)}', space=vmem, size = 0x12000, scoped, tag = 'internal scratch']
  %s0 = inlined_call_operand.vmem [shape: bf16[16,25], index: 0, kind: input, shape index: {}]
  %s1 = inlined_call_operand.vmem [shape: bf16[25,128], index: 1, kind: input, shape index: {}]
  %s2 = inlined_call_operand.vmem [shape: f32[1,128], index: 2, kind: input, shape index: {}]
  %s3 = inlined_call_operand.vmem [shape: bf16[128,64], index: 3, kind: input, shape index: {}]
  %s4 = inlined_call_operand.vmem [shape: f32[1,64], index: 4, kind: input, shape index: {}]
  %s5 = inlined_call_operand.vmem [shape: f32[1,64], index: 5, kind: input, shape index: {}]
  %s6 = inlined_call_operand.vmem [shape: f32[16,1], index: 6, kind: output, shape index: {}]
  %s7 = sld [smem:[#allocation0]]
  $region34: #{qnet_forward.1} parent=0
    _
  %s9 = ssub.s32 1, %s7
  %s10 = scalar_select 0, %s9, %s7
  // Predicated region
  $region2: #{qnet_forward.1} parent=0 // pred_check
    _
  $region3: #{qnet_forward.1} parent=0 // pred_check_branch
    %12 = sbr.rel (0) target = $region5
  $region4: #{qnet_forward.1} parent=0 // pred_region
    _
  $region5: #{qnet_forward.1} parent=0 // pred_fallthru
    _
  // Predicated region
  $region6: #{qnet_forward.1} parent=0 // pred_check
    _
  $region7: #{qnet_forward.1} parent=0 // pred_check_branch
    %14 = sbr.rel (0) target = $region9
  $region8: #{qnet_forward.1} parent=0 // pred_region
    _
  $region9: #{qnet_forward.1} parent=0 // pred_fallthru
    _
  // Predicated region
  $region10: #{qnet_forward.1} parent=0 // pred_check
    _
  $region11: #{qnet_forward.1} parent=0 // pred_check_branch
    %16 = sbr.rel (0) target = $region13
  $region12: #{qnet_forward.1} parent=0 // pred_region
    _
  $region13: #{qnet_forward.1} parent=0 // pred_fallthru
    _
  // Predicated region
  $region14: #{qnet_forward.1} parent=0 // pred_check
    _
  $region15: #{qnet_forward.1} parent=0 // pred_check_branch
    %18 = sbr.rel (0) target = $region17
  $region16: #{qnet_forward.1} parent=0 // pred_region
    _
  $region17: #{qnet_forward.1} parent=0 // pred_fallthru
    _
  // Predicated region
  $region18: #{qnet_forward.1} parent=0 // pred_check
    _
  $region19: #{qnet_forward.1} parent=0 // pred_check_branch
    %20 = sbr.rel (0) target = $region21
  $region20: #{qnet_forward.1} parent=0 // pred_region
    _
  $region21: #{qnet_forward.1} parent=0 // pred_fallthru
    _
  // Predicated region
  $region22: #{qnet_forward.1} parent=0 // pred_check
    _
  $region23: #{qnet_forward.1} parent=0 // pred_check_branch
    %22 = sbr.rel (0) target = $region25
  $region24: #{qnet_forward.1} parent=0 // pred_region
    _
  $region25: #{qnet_forward.1} parent=0 // pred_fallthru
    _
  %v24 = vld [vmem:[%s0] sm:$0xf]
  %v25 = vld [vmem:[%s0 + $0x4] sm:$0xf]
  %v26 = vld [vmem:[%s1] sm:$0xf]
  %v27 = vld [vmem:[%s1 + $0x4] sm:$0xf]
  %v28 = vld [vmem:[%s1 + $0x8] sm:$0xf]
  %v29 = vld [vmem:[%s1 + $0xc] sm:$0x1]
  %v30 = vld [vmem:[%s2] sm:$0x1]
  %v32 = vlaneseq
  %v33 = vshrl.u32 %v32, 7
  %v34 = vsub.s32 0, %v33
  %v35 = vrot.slane %v30, %v34
  %v39 = vunpack.c.l.b16 %v24
  %v40 = vunpack.c.l.b16 %v25
  %v41 = vpack.c.b16 %v40, %v39
  %v46 = vunpack.c.l.b16 %v26
  %v47 = vunpack.c.l.b16 %v27
  %v48 = vunpack.c.l.b16 %v28
  %v49 = vunpack.c.l.b16 %v29
  %v50 = vpack.c.b16 %v47, %v46
  %v51 = vpack.c.b16 %v49, %v48
  %vm53 = vcmask 203776
  %v55 = vsel %vm53, %v41, 0
  %vm57 = vcmask 1043456
  %vm58 = vcmask 1044480
  %v59 = vsel %vm57, 4294967295, 65535
  %v60 = vsel %vm58, %v59, 0
  %v62 = vand.u32 %v51, %v60
  %64 = vmatprep.subr.bf16.mxu0 0
  %65 = vmatpush1.bf16.msra.mxu0 0
  %66 = vmatprep.subr.bf16.mxu0 0
  %67 = vmatpush1.bf16.msra.mxu0 0
  %68 = vmatprep.subr.bf16.mxu0 0
  %69 = vmatpush1.bf16.msra.mxu0 0
  %70 = vmatprep.subr.bf16.mxu0 0
  %71 = vmatpush1.bf16.msra.mxu0 0
  %72 = vmatprep.subr.bf16.mxu0 0
  %73 = vmatpush1.bf16.msra.mxu0 0
  %74 = vmatprep.subr.bf16.mxu0 0
  %75 = vmatpush1.bf16.msra.mxu0 0
  %76 = vmatprep.subr.bf16.mxu0 0
  %77 = vmatpush1.bf16.msra.mxu0 %v62
  %78 = vmatprep.subr.bf16.mxu0 0
  %79 = vmatpush1.bf16.msra.mxu0 %v50
  %80 = vmatprep.subr.bf16.mxu0 0
  %81 = vmatpush2.bf16.msra.mxu0 0
  %82 = vmatprep.subr.bf16.mxu0 0
  %83 = vmatpush2.bf16.msra.mxu0 0
  %84 = vmatprep.subr.bf16.mxu0 0
  %85 = vmatpush2.bf16.msra.mxu0 0
  %86 = vmatprep.subr.bf16.mxu0 0
  %87 = vmatpush2.bf16.msra.mxu0 0
  %88 = vmatprep.subr.bf16.mxu0 0
  %89 = vmatpush2.bf16.msra.mxu0 0
  %90 = vmatprep.subr.bf16.mxu0 0
  %91 = vmatpush2.bf16.msra.mxu0 0
  %92 = vmatprep.subr.bf16.mxu0 0
  %93 = vmatpush2.bf16.msra.mxu0 0
  %94 = vmatprep.subr.bf16.mxu0 0
  %95 = vmatpush2.bf16.msra.mxu0 0
  %96 = vmatprep.mubr.bf16.mxu0 0
  %97 = vmatmul.mubr.bf16.gmra.mxu0 %v55
  %v98 = vpop.f32.mrf.mxu0
  %v99 = vadd.f32 %v35, %v98
  %v100 = vpop.f32.mrf.mxu0
  %v101 = vpop.f32.mrf.mxu0
  %v102 = vadd.f32 %v35, %v101
  %v103 = vpop.f32.mrf.mxu0
  %104 = vdwg.mxu0
  %v105 = vmax.f32 %v99, 0.0
  %v106 = vmax.f32 %v102, 0.0
  %v107 = vpack.c.bf16 %v106, %v105
  %v108 = vld [vmem:[%s3] sm:$0xf]
  %v109 = vld [vmem:[%s3 + $0x4] sm:$0xf]
  %v110 = vld [vmem:[%s3 + $0x8] sm:$0xf]
  %v111 = vld [vmem:[%s3 + $0xc] sm:$0xf]
  %v112 = vld [vmem:[%s3 + $0x10] sm:$0xf]
  %v113 = vld [vmem:[%s3 + $0x14] sm:$0xf]
  %v114 = vld [vmem:[%s3 + $0x18] sm:$0xf]
  %v115 = vld [vmem:[%s3 + $0x1c] sm:$0xf]
  %v116 = vld [vmem:[%s3 + $0x20] sm:$0xf]
  %v117 = vld [vmem:[%s3 + $0x24] sm:$0xf]
  %v118 = vld [vmem:[%s3 + $0x28] sm:$0xf]
  %v119 = vld [vmem:[%s3 + $0x2c] sm:$0xf]
  %v120 = vld [vmem:[%s3 + $0x30] sm:$0xf]
  %v121 = vld [vmem:[%s3 + $0x34] sm:$0xf]
  %v122 = vld [vmem:[%s3 + $0x38] sm:$0xf]
  %v123 = vld [vmem:[%s3 + $0x3c] sm:$0xf]
  %v124 = vld [vmem:[%s4] sm:$0x1]
  %v126 = vlaneseq
  %v127 = vshrl.u32 %v126, 7
  %v128 = vsub.s32 0, %v127
  %v129 = vrot.slane %v124, %v128
  %v147 = vunpack.c.l.b16 %v108
  %v148 = vunpack.c.l.b16 %v109
  %v149 = vunpack.c.l.b16 %v110
  %v150 = vunpack.c.l.b16 %v111
  %v151 = vunpack.c.l.b16 %v112
  %v152 = vunpack.c.l.b16 %v113
  %v153 = vunpack.c.l.b16 %v114
  %v154 = vunpack.c.l.b16 %v115
  %v155 = vunpack.c.l.b16 %v116
  %v156 = vunpack.c.l.b16 %v117
  %v157 = vunpack.c.l.b16 %v118
  %v158 = vunpack.c.l.b16 %v119
  %v159 = vunpack.c.l.b16 %v120
  %v160 = vunpack.c.l.b16 %v121
  %v161 = vunpack.c.l.b16 %v122
  %v162 = vunpack.c.l.b16 %v123
  %v163 = vpack.c.b16 %v148, %v147
  %v164 = vpack.c.b16 %v150, %v149
  %v165 = vpack.c.b16 %v152, %v151
  %v166 = vpack.c.b16 %v154, %v153
  %v167 = vpack.c.b16 %v156, %v155
  %v168 = vpack.c.b16 %v158, %v157
  %v169 = vpack.c.b16 %v160, %v159
  %v170 = vpack.c.b16 %v162, %v161
  %179 = vmatprep.subr.bf16.mxu0 0
  %180 = vmatpush1.bf16.msra.mxu0 %v170
  %181 = vmatprep.subr.bf16.mxu0 0
  %182 = vmatpush1.bf16.msra.mxu0 %v169
  %183 = vmatprep.subr.bf16.mxu0 0
  %184 = vmatpush1.bf16.msra.mxu0 %v168
  %185 = vmatprep.subr.bf16.mxu0 0
  %186 = vmatpush1.bf16.msra.mxu0 %v167
  %187 = vmatprep.subr.bf16.mxu0 0
  %188 = vmatpush1.bf16.msra.mxu0 %v166
  %189 = vmatprep.subr.bf16.mxu0 0
  %190 = vmatpush1.bf16.msra.mxu0 %v165
  %191 = vmatprep.subr.bf16.mxu0 0
  %192 = vmatpush1.bf16.msra.mxu0 %v164
  %193 = vmatprep.subr.bf16.mxu0 0
  %194 = vmatpush1.bf16.msra.mxu0 %v163
  %195 = vmatprep.subr.bf16.mxu0 0
  %196 = vmatpush2.bf16.msra.mxu0 0
  %197 = vmatprep.subr.bf16.mxu0 0
  %198 = vmatpush2.bf16.msra.mxu0 0
  %199 = vmatprep.subr.bf16.mxu0 0
  %200 = vmatpush2.bf16.msra.mxu0 0
  %201 = vmatprep.subr.bf16.mxu0 0
  %202 = vmatpush2.bf16.msra.mxu0 0
  %203 = vmatprep.subr.bf16.mxu0 0
  %204 = vmatpush2.bf16.msra.mxu0 0
  %205 = vmatprep.subr.bf16.mxu0 0
  %206 = vmatpush2.bf16.msra.mxu0 0
  %207 = vmatprep.subr.bf16.mxu0 0
  %208 = vmatpush2.bf16.msra.mxu0 0
  %209 = vmatprep.subr.bf16.mxu0 0
  %210 = vmatpush2.bf16.msra.mxu0 0
  %211 = vmatprep.mubr.bf16.mxu0 0
  %212 = vmatmul.mubr.bf16.gmra.mxu0 %v107
  %v213 = vpop.f32.mrf.mxu0
  %v214 = vadd.f32 %v129, %v213
  %v215 = vpop.f32.mrf.mxu0
  %v216 = vpop.f32.mrf.mxu0
  %v217 = vadd.f32 %v129, %v216
  %v218 = vpop.f32.mrf.mxu0
  %219 = vdwg.mxu0
  %v220 = vmax.f32 %v214, 0.0
  %v221 = vmax.f32 %v217, 0.0
  %v222 = vld [vmem:[%s5] sm:$0x1]
  %v224 = vlaneseq
  %v225 = vshrl.u32 %v224, 7
  %v226 = vsub.s32 0, %v225
  %v227 = vrot.slane %v222, %v226
  %v229 = vmul.f32 %v220, %v227
  %v230 = vmul.f32 %v221, %v227
  %vm231 = vcmask 523264
  %v232 = vsel %vm231, %v229, 0.0
  %233 = vadd.xlane.f32.xlu0 %v232
  %v234 = vpop.xlane.xlu0 %233
  %v235 = vsel %vm231, %v230, 0.0
  %236 = vadd.xlane.f32.xlu0 %v235
  %v237 = vpop.xlane.xlu0 %236
  %vm238 = vcmask 7168
  %239 = vst.msk [vmem:[%s6] sm:$0xff] %vm238, %v234
  %240 = vst.msk [vmem:[%s6 + $0x8] sm:$0xff] %vm238, %v237
  // Predicated region
  $region26: #{qnet_forward.1} parent=0 // pred_check
    _
  $region27: #{qnet_forward.1} parent=0 // pred_check_branch
    %242 = sbr.rel (0) target = $region29
  $region28: #{qnet_forward.1} parent=0 // pred_region
    _
  $region29: #{qnet_forward.1} parent=0 // pred_fallthru
    _
  // Predicated region
  $region30: #{qnet_forward.1} parent=0 // pred_check
    _
  $region31: #{qnet_forward.1} parent=0 // pred_check_branch
    %244 = sbr.rel (0) target = $region33
  $region32: #{qnet_forward.1} parent=0 // pred_region
    _
  $region33: #{qnet_forward.1} parent=0 // pred_fallthru
    _

</llo_original>
